<compile_context>
chip_gen: v7x
topology: tpu7x:2x2x1
jax: 0.10.0
libtpu: 0.0.40
codegen_flags: <defaults>
</compile_context>

<pallas_src>
import functools

import jax
import jax.numpy as jnp
from jax.experimental import pallas as pl
from jax.experimental.pallas import tpu as pltpu


def _enhanced_lr_kernel(b_ref, x_ref, w_ref, o_ref, *, approx_sigmoid):
    # b_ref: SMEM (1, 1) scalar bias
    # x_ref: VMEM (TB, D) batch tile (native dtype; upcast here, not in wrapper)
    # w_ref: VMEM (1, D)  weight row, resident across all grid steps
    # o_ref: VMEM (TB, 1) sigmoid(x @ w.T + b)
    x = x_ref[...].astype(jnp.float32)          # in-kernel upcast (v5e has no bf16 VPU)
    w = w_ref[...].astype(jnp.float32)          # (1, D) broadcasts over batch rows
    # Row-wise dot product: VPU multiply + XLU lane reduce (MXU deliberately avoided).
    s = jnp.sum(x * w, axis=-1, keepdims=True) + b_ref[0, 0]    # (TB, 1)
    # sigmoid(s) = 1 / (1 + exp(-s)); exp -> EUP.  approx_sigmoid=True puts the
    # reciprocal on the EUP too (free slot); False is an exact divide for tight
    # numerical agreement with the f32 reference.
    z = jnp.exp(-s)
    o_ref[...] = pl.reciprocal(1.0 + z, approx=approx_sigmoid)


def _pick_block_b(B, D, itemsize):
    """Largest batch tile whose double-buffered x slab fits a conservative VMEM budget."""
    budget = 12 * 1024 * 1024                   # bytes for the 2 pipelined x buffers
    rows = max(8, budget // (2 * D * itemsize))
    if rows >= B:
        return B                                # one block covering the full batch
    return max(8, (rows // 8) * 8)              # keep sublane (8) alignment


def enhanced_lr_forward(x, weight, bias, *, block_b=None, approx_sigmoid=False):
    """sigmoid(x @ weight.T + bias), matching EnhancedLR.forward.

    x:      (B, D) float32 or bfloat16 -- streamed in its native dtype.
    weight: (1, D), bias: (1,)         -- nn.Linear(D, 1) parameters.
    returns (B, 1) float32.
    """
    B, D = x.shape
    assert weight.shape == (1, D) and bias.shape == (1,)

    if block_b is None:
        block_b = _pick_block_b(B, D, x.dtype.itemsize)
    block_b = min(block_b, B)
    if block_b < B and block_b % 8 != 0:
        block_b = max(8, (block_b // 8) * 8)
    grid = (pl.cdiv(B, block_b),)

    b2 = bias.reshape(1, 1).astype(jnp.float32)        # scalar -> SMEM

    kernel = functools.partial(_enhanced_lr_kernel, approx_sigmoid=approx_sigmoid)
    bytes_accessed = (x.size * x.dtype.itemsize
                      + weight.size * weight.dtype.itemsize
                      + 4 + B * 4)

    return pl.pallas_call(
        kernel,
        out_shape=jax.ShapeDtypeStruct((B, 1), jnp.float32),
        grid=grid,
        in_specs=[
            pl.BlockSpec(memory_space=pltpu.MemorySpace.SMEM),   # bias scalar (whole array)
            pl.BlockSpec((block_b, D), lambda i: (i, 0)),        # x: batch-tiled, pipelined
            pl.BlockSpec((1, D), lambda i: (0, 0)),              # weight: constant -> resident
        ],
        out_specs=pl.BlockSpec((block_b, 1), lambda i: (i, 0)),
        compiler_params=pltpu.CompilerParams(
            dimension_semantics=("parallel",),       # v7x: shard batch tiles across 2 TCs
            vmem_limit_bytes=32 * 1024 * 1024,       # explicit, with headroom on v7x's 64 MiB
        ),
        cost_estimate=pl.CostEstimate(
            flops=2 * B * D + 4 * B,
            transcendentals=B,
            bytes_accessed=bytes_accessed),
    )(b2, x, weight)


def reference_forward(x, weight, bias):
    logits = jnp.dot(x.astype(jnp.float32), weight.astype(jnp.float32).T,
                     precision=jax.lax.Precision.HIGHEST) + bias.astype(jnp.float32)
    return jax.nn.sigmoid(logits)


if __name__ == "__main__":
    B, D = 24, 32     # small demo: batch=24, input_dim=32
    key = jax.random.PRNGKey(0)
    kx, kw, kb = jax.random.split(key, 3)

    x = jax.random.normal(kx, (B, D), dtype=jnp.float32)
    # PyTorch-like uniform(-1/sqrt(D), 1/sqrt(D)) init for nn.Linear(D, 1).
    bound = 1.0 / jnp.sqrt(jnp.float32(D))
    weight = jax.random.uniform(kw, (1, D), jnp.float32, -bound, bound)
    bias = jax.random.uniform(kb, (1,), jnp.float32, -bound, bound)

    ref = reference_forward(x, weight, bias)

    # Exact-sigmoid path, forced small tile (block_b=8) so the 3-step batch grid,
    # pipelining and the resident-weight index_map are actually exercised.
    out = jax.block_until_ready(enhanced_lr_forward(x, weight, bias, block_b=8))
    assert out.shape == (B, 1)
    assert jnp.allclose(out, ref, atol=1e-4, rtol=1e-4)

    # Production fast path: EUP approx-reciprocal epilogue (looser tolerance).
    out_fast = jax.block_until_ready(
        enhanced_lr_forward(x, weight, bias, approx_sigmoid=True))
    assert out_fast.shape == (B, 1)
    assert jnp.allclose(out_fast, ref, atol=1e-2, rtol=1e-2)

    print("KERNEL_OK")
</pallas_src>

<mosaic_0001>
module attributes {stable_mosaic.version = 11 : i64} {
  func.func @_enhanced_lr_kernel(%arg0: i32, %arg1: memref<1x1xf32, #tpu.memory_space<smem>>, %arg2: memref<8x32xf32, #tpu.memory_space<vmem>>, %arg3: memref<1x32xf32, #tpu.memory_space<vmem>>, %arg4: memref<8x1xf32, #tpu.memory_space<vmem>>) attributes {dimension_semantics = [#tpu.dimension_semantics<parallel>], iteration_bounds = array<i64: 3>, scalar_prefetch = 0 : i64, scratch_operands = 0 : i64, tpu.core_type = #tpu.core_type<tc>, window_params = [{transform_indices = @transform_0, window_bounds = array<i64: 1, 1>}, {transform_indices = @transform_1, window_bounds = array<i64: 8, 32>}, {pipeline_mode = #tpu.pipeline_mode<synchronous>, transform_indices = @transform_2, window_bounds = array<i64: 1, 32>}, {transform_indices = @transform_3, window_bounds = array<i64: 8, 1>}]} {
    %c0 = arith.constant 0 : index
    %c0_0 = arith.constant 0 : index
    %0 = vector.load %arg2[%c0, %c0_0] : memref<8x32xf32, #tpu.memory_space<vmem>>, vector<8x32xf32>
    %c0_1 = arith.constant 0 : index
    %c0_2 = arith.constant 0 : index
    %1 = vector.load %arg3[%c0_1, %c0_2] : memref<1x32xf32, #tpu.memory_space<vmem>>, vector<1x32xf32>
    %2 = vector.broadcast %1 : vector<1x32xf32> to vector<8x32xf32>
    %3 = arith.mulf %0, %2 : vector<8x32xf32>
    %cst = arith.constant dense<0.000000e+00> : vector<8xf32>
    %4 = vector.multi_reduction <add>, %3, %cst [1] : vector<8x32xf32> to vector<8xf32>
    %5 = vector.shape_cast %4 : vector<8xf32> to vector<8x1xf32>
    %c0_3 = arith.constant 0 : index
    %c0_4 = arith.constant 0 : index
    %6 = memref.load %arg1[%c0_3, %c0_4] : memref<1x1xf32, #tpu.memory_space<smem>>
    %7 = vector.broadcast %6 : f32 to vector<8x1xf32>
    %8 = arith.addf %5, %7 : vector<8x1xf32>
    %cst_5 = arith.constant 0.000000e+00 : f32
    %9 = vector.broadcast %cst_5 : f32 to vector<8x1xf32>
    %10 = arith.subf %9, %8 : vector<8x1xf32>
    %11 = math.exp %10 : vector<8x1xf32>
    %cst_6 = arith.constant 1.000000e+00 : f32
    %12 = vector.broadcast %cst_6 : f32 to vector<8x1xf32>
    %13 = arith.addf %12, %11 : vector<8x1xf32>
    %14 = tpu.reciprocal %13 : vector<8x1xf32> -> vector<8x1xf32>
    %c0_7 = arith.constant 0 : index
    %c0_8 = arith.constant 0 : index
    %15 = vector.load %arg4[%c0_7, %c0_8] : memref<8x1xf32, #tpu.memory_space<vmem>>, vector<8x1xf32>
    tpu.vector_store %arg4[%c0_7, %c0_8], %14 {strides = array<i32>} : memref<8x1xf32, #tpu.memory_space<vmem>>, vector<8x1xf32>,
    return
  }
  func.func @transform_0(%arg0: i32) -> (i32, i32) {
    %c0_i32 = arith.constant 0 : i32
    %c0_i32_0 = arith.constant 0 : i32
    %c0_i32_1 = arith.constant 0 : i32
    return %c0_i32, %c0_i32_0 : i32, i32
  }
  func.func @transform_1(%arg0: i32) -> (i32, i32) {
    %c0_i32 = arith.constant 0 : i32
    %c0_i32_0 = arith.constant 0 : i32
    return %arg0, %c0_i32 : i32, i32
  }
  func.func @transform_2(%arg0: i32) -> (i32, i32) {
    %c0_i32 = arith.constant 0 : i32
    %c0_i32_0 = arith.constant 0 : i32
    %c0_i32_1 = arith.constant 0 : i32
    return %c0_i32, %c0_i32_0 : i32, i32
  }
  func.func @transform_3(%arg0: i32) -> (i32, i32) {
    %c0_i32 = arith.constant 0 : i32
    %c0_i32_0 = arith.constant 0 : i32
    return %arg0, %c0_i32 : i32, i32
  }
}

</mosaic_0001>

<llo_original>
// kernel: tpu_custom_call.1
$region0: #{tpu_custom_call.1}
  #allocation0 [shape = 'u32[]', space=smem, size = 0x4, offset = 0x4, fixed_abs, tag = 'smem constant byte address 0x4 - core index']
  #allocation1 [shape = 'u32[144,128]{1,0:T(1,128)}', space=vmem, size = 0x12000, scoped, tag = 'internal scratch']
  #allocation2 [shape = 'f32[1,1]{1,0:T(1,128)S(6)}', space=smem, size = 0x200, scoped, tag = 'scoped memory for tpu_custom_call.1']
  %s0 = inlined_call_operand.<no memory space> [shape: f32[1,1], index: 0, kind: input, shape index: {}]
  %s1 = inlined_call_operand.hbm [shape: f32[24,32], index: 1, kind: input, shape index: {}]
  %s2 = inlined_call_operand.vmem [shape: f32[1,32], index: 2, kind: input, shape index: {}]
  %s3 = inlined_call_operand.vmem [shape: f32[24,1], index: 3, kind: output, shape index: {}]
  %s4 = sld [smem:[#allocation0]]
  $region49: #{tpu_custom_call.1} parent=0
    _
  %s6 = ssub.s32 1, %s4
  %s7 = scalar_select 0, %s6, %s4
  %8 = sst [smem:[#allocation2]] %s0
  $region1: #{tpu_custom_call.1} parent=0
    #allocation3 [shape = 'u8[8192]{0}', space=vmem, size = 0x2000, scoped, tag = 'input window, operand 1']
    #allocation4 [shape = 's32[2]{0}', space=sflag, size = 0x8, scoped, tag = 'scoped memory for tpu_custom_call.1']
    %9 = vsyncpa [#allocation4], 0
    %s10 = scalar_lea.sflag [#allocation4], 1
    %11 = vsyncpa %s10, 0
    loop: start=0, step=1, limit=5
    $region2: #{tpu_custom_call.1} parent=1 // loop_pre_header
      _
    $region3: #{tpu_custom_call.1} parent=1 // loop_header
      %s13 = sphi 0, %s17
      %p14 = scmp.ge.s32.totalorder %s13, 5
      %s21 = sphi 0, %s21
      %s23 = sphi 0, %s21
      %s24 = sphi 0, %s23
      %s38 = sphi 0, %s24
      %s44 = sphi 0, %s46
      %s47 = sphi 0, %s44
      %s48 = sphi 0, %s47
      %s64 = sphi 0, %s48
      %s68 = sphi 0, %s68
      %s70 = sphi 0, %s68
      %s71 = sphi 0, %s70
      %s85 = sphi 0, %s71
      %s91 = sphi 0, %s93
      %s94 = sphi 0, %s91
      %s95 = sphi 0, %s94
      %s111 = sphi 0, %s95
    $region4: #{tpu_custom_call.1} parent=1 // loop_header_branch
      %16 = sbr.rel (%p14) target = $region8
    $region5: #{tpu_custom_call.1} parent=1 // loop_body
      %s18 = ssub.s32 %s13, 1
      %s19 = ssub.s32 %s13, 2
      %s20 = sadd.s32 %s13, 1
      %s22 = sadd.s32 %s21, 1
      %p25 = scmp.eq.s32.totalorder %s13, 2
      %p26 = scmp.ne.s32.totalorder %s21, %s23
      %p27 = scmp.eq.s32.totalorder %s13, 0
      %p28 = por %p26, %p27
      %p29 = scmp.ne.s32.totalorder %s21, %s23
      %p30 = scmp.eq.s32.totalorder %s18, 2
      %p31 = por %p29, %p30
      %p32 = scmp.ne.s32.totalorder %s23, %s24
      %p33 = scmp.eq.s32.totalorder %s18, 0
      %p34 = por %p32, %p33
      %p35 = scmp.ne.s32.totalorder %s23, %s24
      %p36 = scmp.eq.s32.totalorder %s19, 2
      %p37 = por %p35, %p36
      %p39 = scmp.ne.s32.totalorder %s24, %s38
      %p40 = scmp.eq.s32.totalorder %s19, 0
      %p41 = por %p39, %p40
      %s42 = ssub.s32 %s13, %s20
      %p43 = scmp.eq.s32.totalorder %s42, 0
      %s45 = sadd.s32 %s44, 1
      %s46 = scalar_select %p43, %s44, %s45
      %p49 = pneg %p43
      %p50 = scmp.eq.s32.totalorder %s13, 2
      %p51 = por %p49, %p50
      %p52 = scmp.ne.s32.totalorder %s44, %s47
      %p53 = scmp.eq.s32.totalorder %s13, 0
      %p54 = por %p52, %p53
      %p55 = scmp.ne.s32.totalorder %s44, %s47
      %p56 = scmp.eq.s32.totalorder %s18, 2
      %p57 = por %p55, %p56
      %p58 = scmp.ne.s32.totalorder %s47, %s48
      %p59 = scmp.eq.s32.totalorder %s18, 0
      %p60 = por %p58, %p59
      %p61 = scmp.ne.s32.totalorder %s47, %s48
      %p62 = scmp.eq.s32.totalorder %s19, 2
      %p63 = por %p61, %p62
      %p65 = scmp.ne.s32.totalorder %s48, %s64
      %p66 = scmp.eq.s32.totalorder %s19, 0
      %p67 = por %p65, %p66
      %s69 = sadd.s32 %s68, 1
      %p72 = scmp.eq.s32.totalorder %s13, 2
      %p73 = scmp.ne.s32.totalorder %s68, %s70
      %p74 = scmp.eq.s32.totalorder %s13, 0
      %p75 = por %p73, %p74
      %p76 = scmp.ne.s32.totalorder %s68, %s70
      %p77 = scmp.eq.s32.totalorder %s18, 2
      %p78 = por %p76, %p77
      %p79 = scmp.ne.s32.totalorder %s70, %s71
      %p80 = scmp.eq.s32.totalorder %s18, 0
      %p81 = por %p79, %p80
      %p82 = scmp.ne.s32.totalorder %s70, %s71
      %p83 = scmp.eq.s32.totalorder %s19, 2
      %p84 = por %p82, %p83
      %p86 = scmp.ne.s32.totalorder %s71, %s85
      %p87 = scmp.eq.s32.totalorder %s19, 0
      %p88 = por %p86, %p87
      %s89 = ssub.s32 %s13, %s20
      %p90 = scmp.eq.s32.totalorder %s89, 0
      %s92 = sadd.s32 %s91, 1
      %s93 = scalar_select %p90, %s91, %s92
      %p96 = pneg %p90
      %p97 = scmp.eq.s32.totalorder %s13, 2
      %p98 = por %p96, %p97
      %p99 = scmp.ne.s32.totalorder %s91, %s94
      %p100 = scmp.eq.s32.totalorder %s13, 0
      %p101 = por %p99, %p100
      %p102 = scmp.ne.s32.totalorder %s91, %s94
      %p103 = scmp.eq.s32.totalorder %s18, 2
      %p104 = por %p102, %p103
      %p105 = scmp.ne.s32.totalorder %s94, %s95
      %p106 = scmp.eq.s32.totalorder %s18, 0
      %p107 = por %p105, %p106
      %p108 = scmp.ne.s32.totalorder %s94, %s95
      %p109 = scmp.eq.s32.totalorder %s19, 2
      %p110 = por %p108, %p109
      %p112 = scmp.ne.s32.totalorder %s95, %s111
      %p113 = scmp.eq.s32.totalorder %s19, 0
      %p114 = por %p112, %p113
      %p115 = scmp.le.s32.totalorder 1, %s13
      %p116 = scmp.lt.s32.totalorder %s13, 4
      %p117 = pnand %p115, %p116
      %p118 = pneg %p117
      // Predicated region
      $region9: #{tpu_custom_call.1} parent=5 // pred_check
        _
      $region10: #{tpu_custom_call.1} parent=5 // pred_check_branch
        %120 = sbr.rel (%p117) target = $region12
      $region11: #{tpu_custom_call.1} parent=5 // pred_region
        %s121 = ssub.s32 %s13, 1
        // Predicated region
        $region13: #{tpu_custom_call.1} parent=11 // pred_check
          %p122 = pneg %p34
        $region14: #{tpu_custom_call.1} parent=11 // pred_check_branch
          %124 = sbr.rel (%p122) target = $region16
        $region15: #{tpu_custom_call.1} parent=11 // pred_region
          _
        $region16: #{tpu_custom_call.1} parent=11 // pred_fallthru
          _
        // Predicated region
        $region17: #{tpu_custom_call.1} parent=11 // pred_check
          %p125 = pneg %p81
        $region18: #{tpu_custom_call.1} parent=11 // pred_check_branch
          %127 = sbr.rel (%p125) target = $region20
        $region19: #{tpu_custom_call.1} parent=11 // pred_region
          _
        $region20: #{tpu_custom_call.1} parent=11 // pred_fallthru
          _
      $region12: #{tpu_custom_call.1} parent=5 // pred_fallthru
        _
      %p128 = scmp.lt.s32.totalorder %s13, 3
      // Predicated region
      $region21: #{tpu_custom_call.1} parent=5 // pred_check
        %p129 = pneg %p128
      $region22: #{tpu_custom_call.1} parent=5 // pred_check_branch
        %131 = sbr.rel (%p129) target = $region24
      $region23: #{tpu_custom_call.1} parent=5 // pred_region
        // Predicated region
        $region25: #{tpu_custom_call.1} parent=23 // pred_check
          %p132 = pneg %p54
        $region26: #{tpu_custom_call.1} parent=23 // pred_check_branch
          %134 = sbr.rel (%p132) target = $region28
        $region27: #{tpu_custom_call.1} parent=23 // pred_region
          %s135 = sand.u32 %s44, 1
          %s136 = scalar_lea.sflag [#allocation4], %s135
          %s137 = sand.u32 %s44, 1
          %s138 = smul.addr %s137, 8
          %s139 = scalar_lea.vmem [#allocation3], %s138
          %s141 = ssub.s32 128, 128
          %142 = vsyncadd %s136, %s141
          %s143 = smul.addr %s13, 128
          %s144 = scalar_lea.hbm %s1, %s143
          %s146 = sshll.u32 %s139, 4
          %s147 = int_to_ptr.vmem [resolvable:$true] %s146
          %149 = dma.hbm_to_vmem [thread:$0]  %s144, 128, %s147, %s136
        $region28: #{tpu_custom_call.1} parent=23 // pred_fallthru
          _
      $region24: #{tpu_custom_call.1} parent=5 // pred_fallthru
        _
      %p150 = scmp.le.s32.totalorder 1, %s13
      %p151 = scmp.lt.s32.totalorder %s13, 4
      %p152 = pnand %p150, %p151
      %p153 = pneg %p152
      // Predicated region
      $region29: #{tpu_custom_call.1} parent=5 // pred_check
        _
      $region30: #{tpu_custom_call.1} parent=5 // pred_check_branch
        %155 = sbr.rel (%p152) target = $region32
      $region31: #{tpu_custom_call.1} parent=5 // pred_region
        %s156 = ssub.s32 %s13, 1
        %s157 = sand.u32 %s47, 1
        %s158 = scalar_lea.sflag [#allocation4], %s157
        %s159 = sand.u32 %s47, 1
        %s160 = smul.addr %s159, 8
        %s161 = scalar_lea.vmem [#allocation3], %s160
        // Predicated region
        $region33: #{tpu_custom_call.1} parent=31 // pred_check
          %p162 = pneg %p60
        $region34: #{tpu_custom_call.1} parent=31 // pred_check_branch
          %164 = sbr.rel (%p162) target = $region36
        $region35: #{tpu_custom_call.1} parent=31 // pred_region
          %165 = dma.done %s158, 128
        $region36: #{tpu_custom_call.1} parent=31 // pred_fallthru
          _
        %p166 = pneg %p34
        %p167 = pneg %p31
        %s168 = sand.u32 %s47, 1
        %s169 = scalar_lea.sflag [#allocation4], %s168
        %s170 = sand.u32 %s47, 1
        %s171 = smul.addr %s170, 8
        %s172 = scalar_lea.vmem [#allocation3], %s171
        %p173 = pneg %p60
        %p174 = pneg %p57
        %p175 = pneg %p81
        %p176 = pneg %p78
        %p177 = pneg %p107
        %p178 = pneg %p104
        %p179 = scmp.lt.s32.totalorder %s18, 2
        %s180 = scalar_select %p179, %s18, 2
        %s181 = smul.addr %s180, 8
        %s182 = scalar_lea.vmem %s3, %s181
        %p183 = scmp.lt.s32.totalorder %s18, 2
        %s184 = scalar_select %p183, %s18, 2
        %s185 = smul.addr %s184, 8
        %s186 = scalar_lea.vmem %s3, %s185
        %v187 = vld [vmem:[%s161] sm:$0xff]
        %v188 = vld [vmem:[%s2] sm:$0x1]
        %v190 = vlaneseq
        %v191 = vshrl.u32 %v190, 7
        %v192 = vsub.s32 0, %v191
        %v193 = vrot.slane %v188, %v192
        %v195 = vmul.f32 %v187, %v193
        %vm196 = vcmask 261120
        %v197 = vsel %vm196, %v195, 0.0
        %198 = vadd.xlane.f32.xlu0 %v197
        %v199 = vpop.xlane.xlu0 %198
        %s200 = sld [smem:[#allocation2]]
        %v201 = vstv %s200
        %v202 = vadd.f32 %v199, %v201
        %v203 = vsub.f32 0.0, %v202
        %v204 = vmul.f32 %v203, 1.442695
        %v205 = vpow.pop %v204
        %v206 = vadd.f32 %v205, 1.0
        %v207 = vrcp.pop %v206
        %vm208 = vcmask 7168
        %209 = vst.msk [vmem:[%s186] sm:$0xff] %vm208, %v207
        %p210 = scmp.lt.s32.totalorder %s18, 2
        %s211 = scalar_select %p210, %s18, 2
        %s212 = smul.addr %s211, 8
        %s213 = scalar_lea.vmem %s3, %s212
        // Predicated region
        $region37: #{tpu_custom_call.1} parent=31 // pred_check
          %p214 = pneg %p104
        $region38: #{tpu_custom_call.1} parent=31 // pred_check_branch
          %216 = sbr.rel (%p214) target = $region40
        $region39: #{tpu_custom_call.1} parent=31 // pred_region
          _
        $region40: #{tpu_custom_call.1} parent=31 // pred_fallthru
          _
      $region32: #{tpu_custom_call.1} parent=5 // pred_fallthru
        _
      %p217 = scmp.le.s32.totalorder 2, %s13
      // Predicated region
      $region41: #{tpu_custom_call.1} parent=5 // pred_check
        %p218 = pneg %p217
      $region42: #{tpu_custom_call.1} parent=5 // pred_check_branch
        %220 = sbr.rel (%p218) target = $region44
      $region43: #{tpu_custom_call.1} parent=5 // pred_region
        %s221 = ssub.s32 %s13, 2
        // Predicated region
        $region45: #{tpu_custom_call.1} parent=43 // pred_check
          %p222 = pneg %p110
        $region46: #{tpu_custom_call.1} parent=43 // pred_check_branch
          %224 = sbr.rel (%p222) target = $region48
        $region47: #{tpu_custom_call.1} parent=43 // pred_region
          %p225 = scmp.lt.s32.totalorder %s19, 2
          %s226 = scalar_select %p225, %s19, 2
          %s227 = smul.addr %s226, 8
          %s228 = scalar_lea.vmem %s3, %s227
        $region48: #{tpu_custom_call.1} parent=43 // pred_fallthru
          _
      $region44: #{tpu_custom_call.1} parent=5 // pred_fallthru
        _
    $region6: #{tpu_custom_call.1} parent=1 // loop_footer
      %s17 = sadd.s32 1, %s13
    $region7: #{tpu_custom_call.1} parent=1 // loop_footer_branch
      %12 = sbr.rel target = $region3
    $region8: #{tpu_custom_call.1} parent=1 // loop_exit
      _
    %229 = vsyncpa [#allocation4], 1
    %s230 = scalar_lea.sflag [#allocation4], 1
    %231 = vsyncpa %s230, 1

</llo_original>
